<compile_context>
chip_gen: v5e
topology: v5e:2x2
jax: 0.10.0
libtpu: 0.0.40
codegen_flags: <defaults>
</compile_context>

<pallas_src>
import math

import jax
import jax.numpy as jnp
from jax import lax
from jax.experimental import pallas as pl
from jax.experimental.pallas import tpu as pltpu


def _make_attention_kernel(tb, seq, hidden, num_heads, head_dim, vis):
    def kernel(x_ref, wqkv_ref, bqkv_ref, wo_ref, bo_ref, *rest):
        if vis:
            out_ref, probs_ref, qkv_scr, ctx_scr = rest
        else:
            out_ref, qkv_scr, ctx_scr = rest
            probs_ref = None

        # (tb, S, H) -> (tb*S, H): collapsing leading dims is layout-cheap.
        x = x_ref[...].reshape(tb * seq, hidden)          # bf16 (cast in wrapper)

        # Fused QKV projection: one (tb*S, H) @ (H, 3H) bf16 MXU matmul with
        # f32 accumulation.  Wq / bq arrive pre-scaled by 1/sqrt(head_dim).
        qkv = jnp.dot(x, wqkv_ref[...],
                      preferred_element_type=jnp.float32) + bqkv_ref[...]
        qkv_scr[...] = qkv.astype(jnp.bfloat16)

        # Per-batch-element attention.  pl.loop bounds live ranges for large
        # tb; heads stay statically unrolled so lane offsets are static.
        @pl.loop(0, tb)
        def _(b):
            r0 = pl.multiple_of(b * seq, seq)
            for h in range(num_heads):                    # static, small
                c0 = h * head_dim
                qh = qkv_scr[pl.ds(r0, seq), c0:c0 + head_dim]
                kh = qkv_scr[pl.ds(r0, seq),
                             hidden + c0:hidden + c0 + head_dim]
                vh = qkv_scr[pl.ds(r0, seq),
                             2 * hidden + c0:2 * hidden + c0 + head_dim]

                # scores = qh @ kh^T: contract over head_dim, no explicit
                # transpose (dot_general handles the transposed RHS).
                scores = lax.dot_general(
                    qh, kh, (((1,), (1,)), ((), ())),
                    preferred_element_type=jnp.float32)   # (S, S) f32

                # Numerically stable softmax in f32.
                m = jnp.max(scores, axis=-1, keepdims=True)
                e = jnp.exp(scores - m)
                denom = jnp.sum(e, axis=-1, keepdims=True)
                if vis:
                    # Exact normalization on the vis path (returned probs sum
                    # to 1); writeback in probs_ref.dtype (bf16 by default).
                    probs = e * (1.0 / denom)
                    probs_ref[b, h] = probs.astype(probs_ref.dtype)
                else:
                    # EUP approx reciprocal on the fast path (free slot).
                    probs = e * pl.reciprocal(denom, approx=True)

                # TODO(synk): attention dropout (identity in eval mode).
                ctx_h = jnp.dot(probs.astype(jnp.bfloat16), vh,
                                preferred_element_type=jnp.float32)  # (S, d)

                # Stage context head-major along lanes; head merge + output
                # projection become one big matmul after the loop.
                ctx_scr[pl.ds(r0, seq), c0:c0 + head_dim] = (
                    ctx_h.astype(jnp.bfloat16))

        # Single (tb*S, H) @ (H, H) output projection with K = H (full MXU
        # contraction), instead of nh small K=head_dim accumulations.
        out = jnp.dot(ctx_scr[...], wo_ref[...],
                      preferred_element_type=jnp.float32) + bo_ref[...]
        # TODO(synk): projection dropout (identity in eval mode).
        out_ref[...] = out.reshape(tb, seq, hidden).astype(out_ref.dtype)

    return kernel


def _pick_vmem_limit():
    """Per-generation VMEM budget: ~85% of capacity, capped at 100 MiB."""
    try:
        cap = int(pltpu.get_tpu_info().vmem_capacity_bytes)
    except Exception:
        cap = 64 * 1024 * 1024          # conservative fallback (v7x per-core)
    return min(int(cap * 0.85), 100 * 1024 * 1024)


def _pick_batch_block(B, S, H, nh, vis, out_itemsize, probs_itemsize, budget):
    """Largest tb dividing B that fits the VMEM budget and keeps >=2 steps."""
    bf = 2

    def est(tb):
        v = 0
        v += 2 * tb * S * H * bf                         # x block (double-buf)
        v += 2 * tb * S * H * out_itemsize               # out block
        if vis:
            v += 2 * tb * nh * S * S * probs_itemsize    # probs block
        v += 2 * ((H * 3 * H + H * H) * bf + 4 * H * 4)  # weights + biases
        v += tb * S * 3 * H * bf + tb * S * H * bf       # qkv / ctx scratch
        v += tb * S * 3 * H * 4 + tb * S * H * 4         # live f32 qkv / out
        v += 2 * S * S * 4                               # scores / exp
        return v

    tb = 1
    for cand in range(1, B + 1):
        if B % cand:
            continue
        steps = B // cand
        if B >= 2 and steps < 2:
            continue        # keep >= 2 grid steps (megacore / DMA pipelining)
        if est(cand) <= budget:
            tb = max(tb, cand)
    return tb


def attention_forward(x, params, num_heads, *, vis=True, batch_block=None,
                      probs_dtype=jnp.bfloat16):
    """x: (B, S, H).  params: wq/bq/wk/bk/wv/bv/wo/bo, W stored as (in, out).

    Returns (attention_output, weights); weights is None when vis=False,
    matching the PyTorch module.
    """
    B, S, H = x.shape
    assert H % num_heads == 0
    head_dim = H // num_heads
    out_dtype = x.dtype

    f32 = jnp.float32
    bf16 = jnp.bfloat16
    scale = 1.0 / math.sqrt(head_dim)

    # Fold 1/sqrt(head_dim) into the query projection (free) and fuse Q/K/V
    # weights/biases into one (H, 3H) bf16 matrix / (1, 3H) f32 bias.
    wqkv = jnp.concatenate(
        [params["wq"].astype(f32) * scale,
         params["wk"].astype(f32),
         params["wv"].astype(f32)], axis=1).astype(bf16)            # (H, 3H)
    bqkv = jnp.concatenate(
        [params["bq"].astype(f32) * scale,
         params["bk"].astype(f32),
         params["bv"].astype(f32)]).reshape(1, 3 * H)               # (1, 3H)
    wo = params["wo"].astype(bf16)                                  # (H, H)
    bo = params["bo"].astype(f32).reshape(1, H)                     # (1, H)

    # Activations in bf16 (halves x DMA / VMEM); f32 accumulation in-kernel.
    x_bf = x.astype(bf16)

    vmem_limit = _pick_vmem_limit()
    if batch_block is None:
        tb = _pick_batch_block(B, S, H, num_heads, vis,
                               jnp.dtype(out_dtype).itemsize,
                               jnp.dtype(probs_dtype).itemsize,
                               int(0.6 * vmem_limit))
    else:
        tb = batch_block
    assert B % tb == 0, "batch must be divisible by the batch tile"
    grid = (B // tb,)

    kernel = _make_attention_kernel(tb, S, H, num_heads, head_dim, vis)

    x_spec = pl.BlockSpec((tb, S, H), lambda i: (i, 0, 0))
    out_spec = pl.BlockSpec((tb, S, H), lambda i: (i, 0, 0))
    wqkv_spec = pl.BlockSpec((H, 3 * H), lambda i: (0, 0))   # constant map
    bqkv_spec = pl.BlockSpec((1, 3 * H), lambda i: (0, 0))
    wo_spec = pl.BlockSpec((H, H), lambda i: (0, 0))
    bo_spec = pl.BlockSpec((1, H), lambda i: (0, 0))

    if vis:
        out_shape = (
            jax.ShapeDtypeStruct((B, S, H), out_dtype),
            jax.ShapeDtypeStruct((B, num_heads, S, S), probs_dtype),
        )
        out_specs = (
            out_spec,
            pl.BlockSpec((tb, num_heads, S, S), lambda i: (i, 0, 0, 0)),
        )
    else:
        out_shape = jax.ShapeDtypeStruct((B, S, H), out_dtype)
        out_specs = out_spec

    result = pl.pallas_call(
        kernel,
        out_shape=out_shape,
        grid=grid,
        in_specs=[x_spec, wqkv_spec, bqkv_spec, wo_spec, bo_spec],
        out_specs=out_specs,
        scratch_shapes=[
            pltpu.VMEM((tb * S, 3 * H), bf16),   # fused QKV activations
            pltpu.VMEM((tb * S, H), bf16),       # staged per-head context
        ],
        compiler_params=pltpu.CompilerParams(
            dimension_semantics=("parallel",),
            vmem_limit_bytes=vmem_limit,
        ),
    )(x_bf, wqkv, bqkv, wo, bo)

    if vis:
        out, weights = result
        return out, weights
    return result, None


def _reference(x, params, num_heads):
    B, S, H = x.shape
    d = H // num_heads
    q = x @ params["wq"] + params["bq"]
    k = x @ params["wk"] + params["bk"]
    v = x @ params["wv"] + params["bv"]

    def split(t):
        return t.reshape(B, S, num_heads, d).transpose(0, 2, 1, 3)

    q, k, v = split(q), split(k), split(v)
    scores = jnp.einsum('bhsd,bhtd->bhst', q, k) / math.sqrt(d)
    probs = jax.nn.softmax(scores, axis=-1)
    ctx = jnp.einsum('bhst,bhtd->bhsd', probs, v)
    ctx = ctx.transpose(0, 2, 1, 3).reshape(B, S, H)
    out = ctx @ params["wo"] + params["bo"]
    return out, probs


if __name__ == "__main__":
    # config: hidden_size=32, num_heads=4 (head_size=8); seq=8, batch=4
    B, S, H = 4, 8, 32
    num_heads = 4

    key = jax.random.PRNGKey(0)
    ks = jax.random.split(key, 9)
    init_scale = 0.02
    params = {
        "wq": init_scale * jax.random.normal(ks[0], (H, H), jnp.float32),
        "bq": init_scale * jax.random.normal(ks[1], (H,), jnp.float32),
        "wk": init_scale * jax.random.normal(ks[2], (H, H), jnp.float32),
        "bk": init_scale * jax.random.normal(ks[3], (H,), jnp.float32),
        "wv": init_scale * jax.random.normal(ks[4], (H, H), jnp.float32),
        "bv": init_scale * jax.random.normal(ks[5], (H,), jnp.float32),
        "wo": init_scale * jax.random.normal(ks[6], (H, H), jnp.float32),
        "bo": init_scale * jax.random.normal(ks[7], (H,), jnp.float32),
    }
    x = jax.random.normal(ks[8], (B, S, H), jnp.float32)

    # vis=True path: returns (attention_output, attention_probs)
    out, weights = attention_forward(x, params, num_heads, vis=True)
    out = jax.block_until_ready(out)
    weights = jax.block_until_ready(weights)

    # vis=False path: no probs output declared at all (approx-recip softmax)
    out_novis, w_none = attention_forward(x, params, num_heads, vis=False)
    out_novis = jax.block_until_ready(out_novis)

    ref_out, ref_w = _reference(x, params, num_heads)

    assert out.shape == (B, S, H) and weights.shape == (B, num_heads, S, S)
    assert w_none is None
    # bf16 MXU operands (f32 accumulation), bf16 probs writeback -> slightly
    # looser tolerance than a pure-f32 kernel.
    assert jnp.allclose(out, ref_out, atol=2e-3, rtol=2e-2), \
        float(jnp.max(jnp.abs(out - ref_out)))
    assert jnp.allclose(weights.astype(jnp.float32), ref_w,
                        atol=5e-3, rtol=2e-2), \
        float(jnp.max(jnp.abs(weights.astype(jnp.float32) - ref_w)))
    # vis=False path uses the approx reciprocal -> compare against the
    # reference with the same tolerance (not bitwise against `out`).
    assert jnp.allclose(out_novis, ref_out, atol=2e-3, rtol=2e-2), \
        float(jnp.max(jnp.abs(out_novis - ref_out)))

    print("KERNEL_OK")
</pallas_src>

<mosaic_0001>
module attributes {stable_mosaic.version = 11 : i64} {
  func.func @kernel(%arg0: i32, %arg1: memref<2x8x32xbf16, #tpu.memory_space<vmem>>, %arg2: memref<32x96xbf16, #tpu.memory_space<vmem>>, %arg3: memref<1x96xf32, #tpu.memory_space<vmem>>, %arg4: memref<32x32xbf16, #tpu.memory_space<vmem>>, %arg5: memref<1x32xf32, #tpu.memory_space<vmem>>, %arg6: memref<2x8x32xf32, #tpu.memory_space<vmem>>, %arg7: memref<2x4x8x8xbf16, #tpu.memory_space<vmem>>, %arg8: memref<16x96xbf16, #tpu.memory_space<vmem>>, %arg9: memref<16x32xbf16, #tpu.memory_space<vmem>>) attributes {dimension_semantics = [#tpu.dimension_semantics<parallel>], iteration_bounds = array<i64: 2>, scalar_prefetch = 0 : i64, scratch_operands = 2 : i64, tpu.core_type = #tpu.core_type<tc>, window_params = [{transform_indices = @transform_0, window_bounds = array<i64: 2, 8, 32>}, {pipeline_mode = #tpu.pipeline_mode<synchronous>, transform_indices = @transform_1, window_bounds = array<i64: 32, 96>}, {pipeline_mode = #tpu.pipeline_mode<synchronous>, transform_indices = @transform_2, window_bounds = array<i64: 1, 96>}, {pipeline_mode = #tpu.pipeline_mode<synchronous>, transform_indices = @transform_3, window_bounds = array<i64: 32, 32>}, {pipeline_mode = #tpu.pipeline_mode<synchronous>, transform_indices = @transform_4, window_bounds = array<i64: 1, 32>}, {transform_indices = @transform_5, window_bounds = array<i64: 2, 8, 32>}, {transform_indices = @transform_6, window_bounds = array<i64: 2, 4, 8, 8>}]} {
    %c0 = arith.constant 0 : index
    %c0_0 = arith.constant 0 : index
    %c0_1 = arith.constant 0 : index
    %0 = vector.load %arg1[%c0, %c0_0, %c0_1] : memref<2x8x32xbf16, #tpu.memory_space<vmem>>, vector<2x8x32xbf16>
    %1 = vector.shape_cast %0 : vector<2x8x32xbf16> to vector<16x32xbf16>
    %c0_2 = arith.constant 0 : index
    %c0_3 = arith.constant 0 : index
    %2 = vector.load %arg2[%c0_2, %c0_3] : memref<32x96xbf16, #tpu.memory_space<vmem>>, vector<32x96xbf16>
    %cst = arith.constant dense<0.000000e+00> : vector<16x96xf32>
    %3 = tpu.matmul %1, %2, %cst {dimension_numbers = #tpu.dot_dimension_numbers<[1], [0], [0], [1], [0, 0, 1, 1], [], []>} : vector<16x32xbf16>, vector<32x96xbf16>, vector<16x96xf32> -> vector<16x96xf32>
    %c0_4 = arith.constant 0 : index
    %c0_5 = arith.constant 0 : index
    %4 = vector.load %arg3[%c0_4, %c0_5] : memref<1x96xf32, #tpu.memory_space<vmem>>, vector<1x96xf32>
    %5 = vector.broadcast %4 : vector<1x96xf32> to vector<16x96xf32>
    %6 = arith.addf %3, %5 : vector<16x96xf32>
    %7 = arith.truncf %6 : vector<16x96xf32> to vector<16x96xbf16>
    %c0_6 = arith.constant 0 : index
    %c0_7 = arith.constant 0 : index
    %8 = vector.load %arg8[%c0_6, %c0_7] : memref<16x96xbf16, #tpu.memory_space<vmem>>, vector<16x96xbf16>
    tpu.vector_store %arg8[%c0_6, %c0_7], %7 {strides = array<i32>} : memref<16x96xbf16, #tpu.memory_space<vmem>>, vector<16x96xbf16>,
    %c0_i32 = arith.constant 0 : i32
    %c2_i32 = arith.constant 2 : i32
    %9 = arith.addi %c0_i32, %c2_i32 : i32
    %c1_i32 = arith.constant 1 : i32
    scf.for %arg10 = %c0_i32 to %9 step %c1_i32  : i32 {
      %c1_i32_19 = arith.constant 1 : i32
      %18 = arith.muli %arg10, %c1_i32_19 : i32
      %c0_i32_20 = arith.constant 0 : i32
      %19 = arith.addi %c0_i32_20, %18 : i32
      %c8_i32 = arith.constant 8 : i32
      %20 = arith.muli %19, %c8_i32 : i32
      %21 = tpu.assume_multiple %20, 8 : i32
      %22 = arith.index_cast %21 : i32 to index
      %c0_21 = arith.constant 0 : index
      %23 = vector.load %arg8[%22, %c0_21] : memref<16x96xbf16, #tpu.memory_space<vmem>>, vector<8x8xbf16>
      %24 = arith.index_cast %21 : i32 to index
      %c32 = arith.constant 32 : index
      %25 = vector.load %arg8[%24, %c32] : memref<16x96xbf16, #tpu.memory_space<vmem>>, vector<8x8xbf16>
      %26 = arith.index_cast %21 : i32 to index
      %c64 = arith.constant 64 : index
      %27 = vector.load %arg8[%26, %c64] : memref<16x96xbf16, #tpu.memory_space<vmem>>, vector<8x8xbf16>
      %cst_22 = arith.constant dense<0.000000e+00> : vector<8x8xf32>
      %28 = tpu.matmul %23, %25, %cst_22 {dimension_numbers = #tpu.dot_dimension_numbers<[1], [1], [0], [0], [0, 0, 1, 0], [], []>} : vector<8x8xbf16>, vector<8x8xbf16>, vector<8x8xf32> -> vector<8x8xf32>
      %cst_23 = arith.constant dense<0xFF800000> : vector<8xf32>
      %29 = vector.multi_reduction <maximumf>, %28, %cst_23 [1] : vector<8x8xf32> to vector<8xf32>
      %30 = vector.shape_cast %29 : vector<8xf32> to vector<8x1xf32>
      %31 = vector.broadcast %30 : vector<8x1xf32> to vector<8x8xf32>
      %32 = arith.subf %28, %31 : vector<8x8xf32>
      %33 = math.exp %32 : vector<8x8xf32>
      %cst_24 = arith.constant dense<0.000000e+00> : vector<8xf32>
      %34 = vector.multi_reduction <add>, %33, %cst_24 [1] : vector<8x8xf32> to vector<8xf32>
      %35 = vector.shape_cast %34 : vector<8xf32> to vector<8x1xf32>
      %cst_25 = arith.constant 1.000000e+00 : f32
      %36 = vector.broadcast %cst_25 : f32 to vector<8x1xf32>
      %37 = arith.divf %36, %35 : vector<8x1xf32>
      %38 = vector.broadcast %37 : vector<8x1xf32> to vector<8x8xf32>
      %39 = arith.mulf %33, %38 : vector<8x8xf32>
      %40 = arith.truncf %39 : vector<8x8xf32> to vector<8x8xbf16>
      %41 = arith.index_cast %19 : i32 to index
      %c0_26 = arith.constant 0 : index
      %c0_27 = arith.constant 0 : index
      %c0_28 = arith.constant 0 : index
      %42 = vector.load %arg7[%41, %c0_26, %c0_27, %c0_28] : memref<2x4x8x8xbf16, #tpu.memory_space<vmem>>, vector<1x1x8x8xbf16>
      %43 = vector.shape_cast %42 : vector<1x1x8x8xbf16> to vector<8x8xbf16>
      %44 = vector.shape_cast %40 : vector<8x8xbf16> to vector<1x1x8x8xbf16>
      tpu.vector_store %arg7[%41, %c0_26, %c0_27, %c0_28], %44 {strides = array<i32>} : memref<2x4x8x8xbf16, #tpu.memory_space<vmem>>, vector<1x1x8x8xbf16>,
      %45 = arith.truncf %39 : vector<8x8xf32> to vector<8x8xbf16>
      %cst_29 = arith.constant dense<0.000000e+00> : vector<8x8xf32>
      %46 = tpu.matmul %45, %27, %cst_29 {dimension_numbers = #tpu.dot_dimension_numbers<[1], [0], [0], [1], [0, 0, 1, 1], [], []>} : vector<8x8xbf16>, vector<8x8xbf16>, vector<8x8xf32> -> vector<8x8xf32>
      %47 = arith.truncf %46 : vector<8x8xf32> to vector<8x8xbf16>
      %48 = arith.index_cast %21 : i32 to index
      %c0_30 = arith.constant 0 : index
      %49 = vector.load %arg9[%48, %c0_30] : memref<16x32xbf16, #tpu.memory_space<vmem>>, vector<8x8xbf16>
      tpu.vector_store %arg9[%48, %c0_30], %47 {strides = array<i32>} : memref<16x32xbf16, #tpu.memory_space<vmem>>, vector<8x8xbf16>,
      %50 = arith.index_cast %21 : i32 to index
      %c8 = arith.constant 8 : index
      %51 = vector.load %arg8[%50, %c8] : memref<16x96xbf16, #tpu.memory_space<vmem>>, vector<8x8xbf16>
      %52 = arith.index_cast %21 : i32 to index
      %c40 = arith.constant 40 : index
      %53 = vector.load %arg8[%52, %c40] : memref<16x96xbf16, #tpu.memory_space<vmem>>, vector<8x8xbf16>
      %54 = arith.index_cast %21 : i32 to index
      %c72 = arith.constant 72 : index
      %55 = vector.load %arg8[%54, %c72] : memref<16x96xbf16, #tpu.memory_space<vmem>>, vector<8x8xbf16>
      %cst_31 = arith.constant dense<0.000000e+00> : vector<8x8xf32>
      %56 = tpu.matmul %51, %53, %cst_31 {dimension_numbers = #tpu.dot_dimension_numbers<[1], [1], [0], [0], [0, 0, 1, 0], [], []>} : vector<8x8xbf16>, vector<8x8xbf16>, vector<8x8xf32> -> vector<8x8xf32>
      %cst_32 = arith.constant dense<0xFF800000> : vector<8xf32>
      %57 = vector.multi_reduction <maximumf>, %56, %cst_32 [1] : vector<8x8xf32> to vector<8xf32>
      %58 = vector.shape_cast %57 : vector<8xf32> to vector<8x1xf32>
      %59 = vector.broadcast %58 : vector<8x1xf32> to vector<8x8xf32>
      %60 = arith.subf %56, %59 : vector<8x8xf32>
      %61 = math.exp %60 : vector<8x8xf32>
      %cst_33 = arith.constant dense<0.000000e+00> : vector<8xf32>
      %62 = vector.multi_reduction <add>, %61, %cst_33 [1] : vector<8x8xf32> to vector<8xf32>
      %63 = vector.shape_cast %62 : vector<8xf32> to vector<8x1xf32>
      %cst_34 = arith.constant 1.000000e+00 : f32
      %64 = vector.broadcast %cst_34 : f32 to vector<8x1xf32>
      %65 = arith.divf %64, %63 : vector<8x1xf32>
      %66 = vector.broadcast %65 : vector<8x1xf32> to vector<8x8xf32>
      %67 = arith.mulf %61, %66 : vector<8x8xf32>
      %68 = arith.truncf %67 : vector<8x8xf32> to vector<8x8xbf16>
      %69 = arith.index_cast %19 : i32 to index
      %c1 = arith.constant 1 : index
      %c0_35 = arith.constant 0 : index
      %c0_36 = arith.constant 0 : index
      %70 = vector.load %arg7[%69, %c1, %c0_35, %c0_36] : memref<2x4x8x8xbf16, #tpu.memory_space<vmem>>, vector<1x1x8x8xbf16>
      %71 = vector.shape_cast %70 : vector<1x1x8x8xbf16> to vector<8x8xbf16>
      %72 = vector.shape_cast %68 : vector<8x8xbf16> to vector<1x1x8x8xbf16>
      tpu.vector_store %arg7[%69, %c1, %c0_35, %c0_36], %72 {strides = array<i32>} : memref<2x4x8x8xbf16, #tpu.memory_space<vmem>>, vector<1x1x8x8xbf16>,
      %73 = arith.truncf %67 : vector<8x8xf32> to vector<8x8xbf16>
      %cst_37 = arith.constant dense<0.000000e+00> : vector<8x8xf32>
      %74 = tpu.matmul %73, %55, %cst_37 {dimension_numbers = #tpu.dot_dimension_numbers<[1], [0], [0], [1], [0, 0, 1, 1], [], []>} : vector<8x8xbf16>, vector<8x8xbf16>, vector<8x8xf32> -> vector<8x8xf32>
      %75 = arith.truncf %74 : vector<8x8xf32> to vector<8x8xbf16>
      %76 = arith.index_cast %21 : i32 to index
      %c8_38 = arith.constant 8 : index
      %77 = vector.load %arg9[%76, %c8_38] : memref<16x32xbf16, #tpu.memory_space<vmem>>, vector<8x8xbf16>
      tpu.vector_store %arg9[%76, %c8_38], %75 {strides = array<i32>} : memref<16x32xbf16, #tpu.memory_space<vmem>>, vector<8x8xbf16>,
      %78 = arith.index_cast %21 : i32 to index
      %c16 = arith.constant 16 : index
      %79 = vector.load %arg8[%78, %c16] : memref<16x96xbf16, #tpu.memory_space<vmem>>, vector<8x8xbf16>
      %80 = arith.index_cast %21 : i32 to index
      %c48 = arith.constant 48 : index
      %81 = vector.load %arg8[%80, %c48] : memref<16x96xbf16, #tpu.memory_space<vmem>>, vector<8x8xbf16>
      %82 = arith.index_cast %21 : i32 to index
      %c80 = arith.constant 80 : index
      %83 = vector.load %arg8[%82, %c80] : memref<16x96xbf16, #tpu.memory_space<vmem>>, vector<8x8xbf16>
      %cst_39 = arith.constant dense<0.000000e+00> : vector<8x8xf32>
      %84 = tpu.matmul %79, %81, %cst_39 {dimension_numbers = #tpu.dot_dimension_numbers<[1], [1], [0], [0], [0, 0, 1, 0], [], []>} : vector<8x8xbf16>, vector<8x8xbf16>, vector<8x8xf32> -> vector<8x8xf32>
      %cst_40 = arith.constant dense<0xFF800000> : vector<8xf32>
      %85 = vector.multi_reduction <maximumf>, %84, %cst_40 [1] : vector<8x8xf32> to vector<8xf32>
      %86 = vector.shape_cast %85 : vector<8xf32> to vector<8x1xf32>
      %87 = vector.broadcast %86 : vector<8x1xf32> to vector<8x8xf32>
      %88 = arith.subf %84, %87 : vector<8x8xf32>
      %89 = math.exp %88 : vector<8x8xf32>
      %cst_41 = arith.constant dense<0.000000e+00> : vector<8xf32>
      %90 = vector.multi_reduction <add>, %89, %cst_41 [1] : vector<8x8xf32> to vector<8xf32>
      %91 = vector.shape_cast %90 : vector<8xf32> to vector<8x1xf32>
      %cst_42 = arith.constant 1.000000e+00 : f32
      %92 = vector.broadcast %cst_42 : f32 to vector<8x1xf32>
      %93 = arith.divf %92, %91 : vector<8x1xf32>
      %94 = vector.broadcast %93 : vector<8x1xf32> to vector<8x8xf32>
      %95 = arith.mulf %89, %94 : vector<8x8xf32>
      %96 = arith.truncf %95 : vector<8x8xf32> to vector<8x8xbf16>
      %97 = arith.index_cast %19 : i32 to index
      %c2 = arith.constant 2 : index
      %c0_43 = arith.constant 0 : index
      %c0_44 = arith.constant 0 : index
      %98 = vector.load %arg7[%97, %c2, %c0_43, %c0_44] : memref<2x4x8x8xbf16, #tpu.memory_space<vmem>>, vector<1x1x8x8xbf16>
      %99 = vector.shape_cast %98 : vector<1x1x8x8xbf16> to vector<8x8xbf16>
      %100 = vector.shape_cast %96 : vector<8x8xbf16> to vector<1x1x8x8xbf16>
      tpu.vector_store %arg7[%97, %c2, %c0_43, %c0_44], %100 {strides = array<i32>} : memref<2x4x8x8xbf16, #tpu.memory_space<vmem>>, vector<1x1x8x8xbf16>,
      %101 = arith.truncf %95 : vector<8x8xf32> to vector<8x8xbf16>
      %cst_45 = arith.constant dense<0.000000e+00> : vector<8x8xf32>
      %102 = tpu.matmul %101, %83, %cst_45 {dimension_numbers = #tpu.dot_dimension_numbers<[1], [0], [0], [1], [0, 0, 1, 1], [], []>} : vector<8x8xbf16>, vector<8x8xbf16>, vector<8x8xf32> -> vector<8x8xf32>
      %103 = arith.truncf %102 : vector<8x8xf32> to vector<8x8xbf16>
      %104 = arith.index_cast %21 : i32 to index
      %c16_46 = arith.constant 16 : index
      %105 = vector.load %arg9[%104, %c16_46] : memref<16x32xbf16, #tpu.memory_space<vmem>>, vector<8x8xbf16>
      tpu.vector_store %arg9[%104, %c16_46], %103 {strides = array<i32>} : memref<16x32xbf16, #tpu.memory_space<vmem>>, vector<8x8xbf16>,
      %106 = arith.index_cast %21 : i32 to index
      %c24 = arith.constant 24 : index
      %107 = vector.load %arg8[%106, %c24] : memref<16x96xbf16, #tpu.memory_space<vmem>>, vector<8x8xbf16>
      %108 = arith.index_cast %21 : i32 to index
      %c56 = arith.constant 56 : index
      %109 = vector.load %arg8[%108, %c56] : memref<16x96xbf16, #tpu.memory_space<vmem>>, vector<8x8xbf16>
      %110 = arith.index_cast %21 : i32 to index
      %c88 = arith.constant 88 : index
      %111 = vector.load %arg8[%110, %c88] : memref<16x96xbf16, #tpu.memory_space<vmem>>, vector<8x8xbf16>
      %cst_47 = arith.constant dense<0.000000e+00> : vector<8x8xf32>
      %112 = tpu.matmul %107, %109, %cst_47 {dimension_numbers = #tpu.dot_dimension_numbers<[1], [1], [0], [0], [0, 0, 1, 0], [], []>} : vector<8x8xbf16>, vector<8x8xbf16>, vector<8x8xf32> -> vector<8x8xf32>
      %cst_48 = arith.constant dense<0xFF800000> : vector<8xf32>
      %113 = vector.multi_reduction <maximumf>, %112, %cst_48 [1] : vector<8x8xf32> to vector<8xf32>
      %114 = vector.shape_cast %113 : vector<8xf32> to vector<8x1xf32>
      %115 = vector.broadcast %114 : vector<8x1xf32> to vector<8x8xf32>
      %116 = arith.subf %112, %115 : vector<8x8xf32>
      %117 = math.exp %116 : vector<8x8xf32>
      %cst_49 = arith.constant dense<0.000000e+00> : vector<8xf32>
      %118 = vector.multi_reduction <add>, %117, %cst_49 [1] : vector<8x8xf32> to vector<8xf32>
      %119 = vector.shape_cast %118 : vector<8xf32> to vector<8x1xf32>
      %cst_50 = arith.constant 1.000000e+00 : f32
      %120 = vector.broadcast %cst_50 : f32 to vector<8x1xf32>
      %121 = arith.divf %120, %119 : vector<8x1xf32>
      %122 = vector.broadcast %121 : vector<8x1xf32> to vector<8x8xf32>
      %123 = arith.mulf %117, %122 : vector<8x8xf32>
      %124 = arith.truncf %123 : vector<8x8xf32> to vector<8x8xbf16>
      %125 = arith.index_cast %19 : i32 to index
      %c3 = arith.constant 3 : index
      %c0_51 = arith.constant 0 : index
      %c0_52 = arith.constant 0 : index
      %126 = vector.load %arg7[%125, %c3, %c0_51, %c0_52] : memref<2x4x8x8xbf16, #tpu.memory_space<vmem>>, vector<1x1x8x8xbf16>
      %127 = vector.shape_cast %126 : vector<1x1x8x8xbf16> to vector<8x8xbf16>
      %128 = vector.shape_cast %124 : vector<8x8xbf16> to vector<1x1x8x8xbf16>
      tpu.vector_store %arg7[%125, %c3, %c0_51, %c0_52], %128 {strides = array<i32>} : memref<2x4x8x8xbf16, #tpu.memory_space<vmem>>, vector<1x1x8x8xbf16>,
      %129 = arith.truncf %123 : vector<8x8xf32> to vector<8x8xbf16>
      %cst_53 = arith.constant dense<0.000000e+00> : vector<8x8xf32>
      %130 = tpu.matmul %129, %111, %cst_53 {dimension_numbers = #tpu.dot_dimension_numbers<[1], [0], [0], [1], [0, 0, 1, 1], [], []>} : vector<8x8xbf16>, vector<8x8xbf16>, vector<8x8xf32> -> vector<8x8xf32>
      %131 = arith.truncf %130 : vector<8x8xf32> to vector<8x8xbf16>
      %132 = arith.index_cast %21 : i32 to index
      %c24_54 = arith.constant 24 : index
      %133 = vector.load %arg9[%132, %c24_54] : memref<16x32xbf16, #tpu.memory_space<vmem>>, vector<8x8xbf16>
      tpu.vector_store %arg9[%132, %c24_54], %131 {strides = array<i32>} : memref<16x32xbf16, #tpu.memory_space<vmem>>, vector<8x8xbf16>,
    }
    %c2_i32_8 = arith.constant 2 : i32
    %c0_9 = arith.constant 0 : index
    %c0_10 = arith.constant 0 : index
    %10 = vector.load %arg9[%c0_9, %c0_10] : memref<16x32xbf16, #tpu.memory_space<vmem>>, vector<16x32xbf16>
    %c0_11 = arith.constant 0 : index
    %c0_12 = arith.constant 0 : index
    %11 = vector.load %arg4[%c0_11, %c0_12] : memref<32x32xbf16, #tpu.memory_space<vmem>>, vector<32x32xbf16>
    %cst_13 = arith.constant dense<0.000000e+00> : vector<16x32xf32>
    %12 = tpu.matmul %10, %11, %cst_13 {dimension_numbers = #tpu.dot_dimension_numbers<[1], [0], [0], [1], [0, 0, 1, 1], [], []>} : vector<16x32xbf16>, vector<32x32xbf16>, vector<16x32xf32> -> vector<16x32xf32>
    %c0_14 = arith.constant 0 : index
    %c0_15 = arith.constant 0 : index
    %13 = vector.load %arg5[%c0_14, %c0_15] : memref<1x32xf32, #tpu.memory_space<vmem>>, vector<1x32xf32>
    %14 = vector.broadcast %13 : vector<1x32xf32> to vector<16x32xf32>
    %15 = arith.addf %12, %14 : vector<16x32xf32>
    %16 = vector.shape_cast %15 : vector<16x32xf32> to vector<2x8x32xf32>
    %c0_16 = arith.constant 0 : index
    %c0_17 = arith.constant 0 : index
    %c0_18 = arith.constant 0 : index
    %17 = vector.load %arg6[%c0_16, %c0_17, %c0_18] : memref<2x8x32xf32, #tpu.memory_space<vmem>>, vector<2x8x32xf32>
    tpu.vector_store %arg6[%c0_16, %c0_17, %c0_18], %16 {strides = array<i32>} : memref<2x8x32xf32, #tpu.memory_space<vmem>>, vector<2x8x32xf32>,
    return
  }
  func.func @transform_0(%arg0: i32) -> (i32, i32, i32) {
    %c0_i32 = arith.constant 0 : i32
    %c0_i32_0 = arith.constant 0 : i32
    %c0_i32_1 = arith.constant 0 : i32
    return %arg0, %c0_i32, %c0_i32_0 : i32, i32, i32
  }
  func.func @transform_1(%arg0: i32) -> (i32, i32) {
    %c0_i32 = arith.constant 0 : i32
    %c0_i32_0 = arith.constant 0 : i32
    %c0_i32_1 = arith.constant 0 : i32
    return %c0_i32, %c0_i32_0 : i32, i32
  }
  func.func @transform_2(%arg0: i32) -> (i32, i32) {
    %c0_i32 = arith.constant 0 : i32
    %c0_i32_0 = arith.constant 0 : i32
    %c0_i32_1 = arith.constant 0 : i32
    return %c0_i32, %c0_i32_0 : i32, i32
  }
  func.func @transform_3(%arg0: i32) -> (i32, i32) {
    %c0_i32 = arith.constant 0 : i32
    %c0_i32_0 = arith.constant 0 : i32
    %c0_i32_1 = arith.constant 0 : i32
    return %c0_i32, %c0_i32_0 : i32, i32
  }
  func.func @transform_4(%arg0: i32) -> (i32, i32) {
    %c0_i32 = arith.constant 0 : i32
    %c0_i32_0 = arith.constant 0 : i32
    %c0_i32_1 = arith.constant 0 : i32
    return %c0_i32, %c0_i32_0 : i32, i32
  }
  func.func @transform_5(%arg0: i32) -> (i32, i32, i32) {
    %c0_i32 = arith.constant 0 : i32
    %c0_i32_0 = arith.constant 0 : i32
    %c0_i32_1 = arith.constant 0 : i32
    return %arg0, %c0_i32, %c0_i32_0 : i32, i32, i32
  }
  func.func @transform_6(%arg0: i32) -> (i32, i32, i32, i32) {
    %c0_i32 = arith.constant 0 : i32
    %c0_i32_0 = arith.constant 0 : i32
    %c0_i32_1 = arith.constant 0 : i32
    %c0_i32_2 = arith.constant 0 : i32
    return %arg0, %c0_i32, %c0_i32_0, %c0_i32_1 : i32, i32, i32, i32
  }
}

</mosaic_0001>

<llo_original>
// kernel: tpu_custom_call.1
$region0: #{tpu_custom_call.1}
  #allocation0 [shape = 'u32[]', space=smem, size = 0x4, offset = 0x4, fixed_abs, tag = 'smem constant byte address 0x4 - core index']
  #allocation1 [shape = 'u32[72,128]{1,0:T(1,128)}', space=vmem, size = 0x9000, scoped, tag = 'internal scratch']
  #allocation2 [shape = 'bf16[16,96]{1,0:T(8,128)(2,1)}', space=vmem, size = 0x1000, scoped, tag = 'scratch operand']
  #allocation3 [shape = 'bf16[16,32]{1,0:T(8,128)(2,1)}', space=vmem, size = 0x1000, scoped, tag = 'scratch operand']
  %s0 = inlined_call_operand.hbm [shape: bf16[4,8,32], index: 0, kind: input, shape index: {}]
  %s1 = inlined_call_operand.hbm [shape: bf16[32,96], index: 1, kind: input, shape index: {}]
  %s2 = inlined_call_operand.vmem [shape: f32[1,96], index: 2, kind: input, shape index: {}]
  %s3 = inlined_call_operand.hbm [shape: bf16[32,32], index: 3, kind: input, shape index: {}]
  %s4 = inlined_call_operand.vmem [shape: f32[1,32], index: 4, kind: input, shape index: {}]
  %s5 = inlined_call_operand.hbm [shape: f32[4,8,32], index: 5, kind: output, shape index: {0}]
  %s6 = inlined_call_operand.hbm [shape: bf16[4,4,8,8], index: 6, kind: output, shape index: {1}]
  %7 = xla_tuple %s5, %s6
  %s8 = sld [smem:[#allocation0]]
  $region80: #{tpu_custom_call.1} parent=0
    _
  %s10 = ssub.s32 1, %s8
  %s11 = scalar_select 0, %s10, %s8
  $region1: #{tpu_custom_call.1} parent=0
    #allocation4 [shape = 'u8[8192]{0}', space=vmem, size = 0x2000, scoped, tag = 'input window, operand 0']
    #allocation5 [shape = 's32[2]{0}', space=sflag, size = 0x8, scoped, tag = 'scoped memory for tpu_custom_call.1']
    #allocation6 [shape = 's32[2]{0}', space=sflag, size = 0x8, scoped, tag = 'scoped memory for tpu_custom_call.1']
    #allocation7 [shape = 'u8[8192]{0}', space=vmem, size = 0x2000, scoped, tag = 'input window, operand 1, single buffered']
    #allocation8 [shape = 's32[1]{0}', space=sflag, size = 0x4, scoped, tag = 'scoped memory for tpu_custom_call.1']
    #allocation9 [shape = 'u8[8192]{0}', space=vmem, size = 0x2000, scoped, tag = 'input window, operand 3, single buffered']
    #allocation10 [shape = 'u8[16384]{0}', space=vmem, size = 0x4000, scoped, tag = 'output window, operand 0']
    #allocation11 [shape = 'u8[32768]{0}', space=vmem, size = 0x8000, scoped, tag = 'output window, operand 1']
    #allocation12 [shape = 's32[2]{0}', space=sflag, size = 0x8, scoped, tag = 'scoped memory for tpu_custom_call.1']
    %12 = vsyncpa [#allocation5], 0
    %s13 = scalar_lea.sflag [#allocation5], 1
    %14 = vsyncpa %s13, 0
    %15 = vsyncpa [#allocation8], 0
    %16 = vsyncpa [#allocation6], 0
    %s17 = scalar_lea.sflag [#allocation6], 1
    %18 = vsyncpa %s17, 0
    %19 = vsyncpa [#allocation12], 0
    %s20 = scalar_lea.sflag [#allocation12], 1
    %21 = vsyncpa %s20, 0
    loop: start=0, step=1, limit=4
    $region2: #{tpu_custom_call.1} parent=1 // loop_pre_header
      _
    $region3: #{tpu_custom_call.1} parent=1 // loop_header
      %s23 = sphi 0, %s27
      %p24 = scmp.ge.s32.totalorder %s23, 4
      %s33 = sphi 0, %s35
      %s36 = sphi 0, %s33
      %s37 = sphi 0, %s36
      %s53 = sphi 0, %s37
      %s57 = sphi 0, %s57
      %s59 = sphi 0, %s57
      %s60 = sphi 0, %s59
      %s74 = sphi 0, %s60
      %s78 = sphi 0, %s78
      %s80 = sphi 0, %s78
      %s81 = sphi 0, %s80
      %s95 = sphi 0, %s81
      %s99 = sphi 0, %s99
      %s101 = sphi 0, %s99
      %s102 = sphi 0, %s101
      %s116 = sphi 0, %s102
      %s120 = sphi 0, %s120
      %s122 = sphi 0, %s120
      %s123 = sphi 0, %s122
      %s137 = sphi 0, %s123
      %s143 = sphi 0, %s145
      %s146 = sphi 0, %s143
      %s147 = sphi 0, %s146
      %s163 = sphi 0, %s147
      %s169 = sphi 0, %s171
      %s172 = sphi 0, %s169
      %s173 = sphi 0, %s172
      %s189 = sphi 0, %s173
    $region4: #{tpu_custom_call.1} parent=1 // loop_header_branch
      %26 = sbr.rel (%p24) target = $region8
    $region5: #{tpu_custom_call.1} parent=1 // loop_body
      %s28 = ssub.s32 %s23, 1
      %s29 = ssub.s32 %s23, 2
      %s30 = sadd.s32 %s23, 1
      %s31 = ssub.s32 %s23, %s30
      %p32 = scmp.eq.s32.totalorder %s31, 0
      %s34 = sadd.s32 %s33, 1
      %s35 = scalar_select %p32, %s33, %s34
      %p38 = pneg %p32
      %p39 = scmp.eq.s32.totalorder %s23, 1
      %p40 = por %p38, %p39
      %p41 = scmp.ne.s32.totalorder %s33, %s36
      %p42 = scmp.eq.s32.totalorder %s23, 0
      %p43 = por %p41, %p42
      %p44 = scmp.ne.s32.totalorder %s33, %s36
      %p45 = scmp.eq.s32.totalorder %s28, 1
      %p46 = por %p44, %p45
      %p47 = scmp.ne.s32.totalorder %s36, %s37
      %p48 = scmp.eq.s32.totalorder %s28, 0
      %p49 = por %p47, %p48
      %p50 = scmp.ne.s32.totalorder %s36, %s37
      %p51 = scmp.eq.s32.totalorder %s29, 1
      %p52 = por %p50, %p51
      %p54 = scmp.ne.s32.totalorder %s37, %s53
      %p55 = scmp.eq.s32.totalorder %s29, 0
      %p56 = por %p54, %p55
      %s58 = sadd.s32 %s57, 1
      %p61 = scmp.eq.s32.totalorder %s23, 1
      %p62 = scmp.ne.s32.totalorder %s57, %s59
      %p63 = scmp.eq.s32.totalorder %s23, 0
      %p64 = por %p62, %p63
      %p65 = scmp.ne.s32.totalorder %s57, %s59
      %p66 = scmp.eq.s32.totalorder %s28, 1
      %p67 = por %p65, %p66
      %p68 = scmp.ne.s32.totalorder %s59, %s60
      %p69 = scmp.eq.s32.totalorder %s28, 0
      %p70 = por %p68, %p69
      %p71 = scmp.ne.s32.totalorder %s59, %s60
      %p72 = scmp.eq.s32.totalorder %s29, 1
      %p73 = por %p71, %p72
      %p75 = scmp.ne.s32.totalorder %s60, %s74
      %p76 = scmp.eq.s32.totalorder %s29, 0
      %p77 = por %p75, %p76
      %s79 = sadd.s32 %s78, 1
      %p82 = scmp.eq.s32.totalorder %s23, 1
      %p83 = scmp.ne.s32.totalorder %s78, %s80
      %p84 = scmp.eq.s32.totalorder %s23, 0
      %p85 = por %p83, %p84
      %p86 = scmp.ne.s32.totalorder %s78, %s80
      %p87 = scmp.eq.s32.totalorder %s28, 1
      %p88 = por %p86, %p87
      %p89 = scmp.ne.s32.totalorder %s80, %s81
      %p90 = scmp.eq.s32.totalorder %s28, 0
      %p91 = por %p89, %p90
      %p92 = scmp.ne.s32.totalorder %s80, %s81
      %p93 = scmp.eq.s32.totalorder %s29, 1
      %p94 = por %p92, %p93
      %p96 = scmp.ne.s32.totalorder %s81, %s95
      %p97 = scmp.eq.s32.totalorder %s29, 0
      %p98 = por %p96, %p97
      %s100 = sadd.s32 %s99, 1
      %p103 = scmp.eq.s32.totalorder %s23, 1
      %p104 = scmp.ne.s32.totalorder %s99, %s101
      %p105 = scmp.eq.s32.totalorder %s23, 0
      %p106 = por %p104, %p105
      %p107 = scmp.ne.s32.totalorder %s99, %s101
      %p108 = scmp.eq.s32.totalorder %s28, 1
      %p109 = por %p107, %p108
      %p110 = scmp.ne.s32.totalorder %s101, %s102
      %p111 = scmp.eq.s32.totalorder %s28, 0
      %p112 = por %p110, %p111
      %p113 = scmp.ne.s32.totalorder %s101, %s102
      %p114 = scmp.eq.s32.totalorder %s29, 1
      %p115 = por %p113, %p114
      %p117 = scmp.ne.s32.totalorder %s102, %s116
      %p118 = scmp.eq.s32.totalorder %s29, 0
      %p119 = por %p117, %p118
      %s121 = sadd.s32 %s120, 1
      %p124 = scmp.eq.s32.totalorder %s23, 1
      %p125 = scmp.ne.s32.totalorder %s120, %s122
      %p126 = scmp.eq.s32.totalorder %s23, 0
      %p127 = por %p125, %p126
      %p128 = scmp.ne.s32.totalorder %s120, %s122
      %p129 = scmp.eq.s32.totalorder %s28, 1
      %p130 = por %p128, %p129
      %p131 = scmp.ne.s32.totalorder %s122, %s123
      %p132 = scmp.eq.s32.totalorder %s28, 0
      %p133 = por %p131, %p132
      %p134 = scmp.ne.s32.totalorder %s122, %s123
      %p135 = scmp.eq.s32.totalorder %s29, 1
      %p136 = por %p134, %p135
      %p138 = scmp.ne.s32.totalorder %s123, %s137
      %p139 = scmp.eq.s32.totalorder %s29, 0
      %p140 = por %p138, %p139
      %s141 = ssub.s32 %s23, %s30
      %p142 = scmp.eq.s32.totalorder %s141, 0
      %s144 = sadd.s32 %s143, 1
      %s145 = scalar_select %p142, %s143, %s144
      %p148 = pneg %p142
      %p149 = scmp.eq.s32.totalorder %s23, 1
      %p150 = por %p148, %p149
      %p151 = scmp.ne.s32.totalorder %s143, %s146
      %p152 = scmp.eq.s32.totalorder %s23, 0
      %p153 = por %p151, %p152
      %p154 = scmp.ne.s32.totalorder %s143, %s146
      %p155 = scmp.eq.s32.totalorder %s28, 1
      %p156 = por %p154, %p155
      %p157 = scmp.ne.s32.totalorder %s146, %s147
      %p158 = scmp.eq.s32.totalorder %s28, 0
      %p159 = por %p157, %p158
      %p160 = scmp.ne.s32.totalorder %s146, %s147
      %p161 = scmp.eq.s32.totalorder %s29, 1
      %p162 = por %p160, %p161
      %p164 = scmp.ne.s32.totalorder %s147, %s163
      %p165 = scmp.eq.s32.totalorder %s29, 0
      %p166 = por %p164, %p165
      %s167 = ssub.s32 %s23, %s30
      %p168 = scmp.eq.s32.totalorder %s167, 0
      %s170 = sadd.s32 %s169, 1
      %s171 = scalar_select %p168, %s169, %s170
      %p174 = pneg %p168
      %p175 = scmp.eq.s32.totalorder %s23, 1
      %p176 = por %p174, %p175
      %p177 = scmp.ne.s32.totalorder %s169, %s172
      %p178 = scmp.eq.s32.totalorder %s23, 0
      %p179 = por %p177, %p178
      %p180 = scmp.ne.s32.totalorder %s169, %s172
      %p181 = scmp.eq.s32.totalorder %s28, 1
      %p182 = por %p180, %p181
      %p183 = scmp.ne.s32.totalorder %s172, %s173
      %p184 = scmp.eq.s32.totalorder %s28, 0
      %p185 = por %p183, %p184
      %p186 = scmp.ne.s32.totalorder %s172, %s173
      %p187 = scmp.eq.s32.totalorder %s29, 1
      %p188 = por %p186, %p187
      %p190 = scmp.ne.s32.totalorder %s173, %s189
      %p191 = scmp.eq.s32.totalorder %s29, 0
      %p192 = por %p190, %p191
      %p193 = scmp.le.s32.totalorder 1, %s23
      %p194 = scmp.lt.s32.totalorder %s23, 3
      %p195 = pnand %p193, %p194
      %p196 = pneg %p195
      // Predicated region
      $region9: #{tpu_custom_call.1} parent=5 // pred_check
        _
      $region10: #{tpu_custom_call.1} parent=5 // pred_check_branch
        %198 = sbr.rel (%p195) target = $region12
      $region11: #{tpu_custom_call.1} parent=5 // pred_region
        %s199 = ssub.s32 %s23, 1
        // Predicated region
        $region13: #{tpu_custom_call.1} parent=11 // pred_check
          %p200 = pneg %p70
        $region14: #{tpu_custom_call.1} parent=11 // pred_check_branch
          %202 = sbr.rel (%p200) target = $region16
        $region15: #{tpu_custom_call.1} parent=11 // pred_region
          %204 = vsyncadd [#allocation8], 0
          %s205 = sshll.u32 %s1, 4
          %s206 = int_to_ptr.hbm [resolvable:$true] %s205
          %s207 = sshll.u32 [#allocation7], 4
          %s208 = int_to_ptr.vmem [resolvable:$true] %s207
          %213 = dma.hbm_to_vmem [thread:$0]  %s206, 256, %s208, [#allocation8], 64, 64, 4
        $region16: #{tpu_custom_call.1} parent=11 // pred_fallthru
          _
        // Predicated region
        $region17: #{tpu_custom_call.1} parent=11 // pred_check
          %p214 = pneg %p91
        $region18: #{tpu_custom_call.1} parent=11 // pred_check_branch
          %216 = sbr.rel (%p214) target = $region20
        $region19: #{tpu_custom_call.1} parent=11 // pred_region
          _
        $region20: #{tpu_custom_call.1} parent=11 // pred_fallthru
          _
        // Predicated region
        $region21: #{tpu_custom_call.1} parent=11 // pred_check
          %p217 = pneg %p112
        $region22: #{tpu_custom_call.1} parent=11 // pred_check_branch
          %219 = sbr.rel (%p217) target = $region24
        $region23: #{tpu_custom_call.1} parent=11 // pred_region
          %221 = vsyncadd [#allocation8], 0
          %s222 = sshll.u32 %s3, 4
          %s223 = int_to_ptr.hbm [resolvable:$true] %s222
          %s224 = sshll.u32 [#allocation9], 4
          %s225 = int_to_ptr.vmem [resolvable:$true] %s224
          %230 = dma.hbm_to_vmem [thread:$0]  %s223, 256, %s225, [#allocation8], 64, 64, 4
        $region24: #{tpu_custom_call.1} parent=11 // pred_fallthru
          _
        // Predicated region
        $region25: #{tpu_custom_call.1} parent=11 // pred_check
          %p231 = pneg %p133
        $region26: #{tpu_custom_call.1} parent=11 // pred_check_branch
          %233 = sbr.rel (%p231) target = $region28
        $region27: #{tpu_custom_call.1} parent=11 // pred_region
          _
        $region28: #{tpu_custom_call.1} parent=11 // pred_fallthru
          _
      $region12: #{tpu_custom_call.1} parent=5 // pred_fallthru
        _
      %p234 = scmp.lt.s32.totalorder %s23, 2
      // Predicated region
      $region29: #{tpu_custom_call.1} parent=5 // pred_check
        %p235 = pneg %p234
      $region30: #{tpu_custom_call.1} parent=5 // pred_check_branch
        %237 = sbr.rel (%p235) target = $region32
      $region31: #{tpu_custom_call.1} parent=5 // pred_region
        // Predicated region
        $region33: #{tpu_custom_call.1} parent=31 // pred_check
          %p238 = pneg %p43
        $region34: #{tpu_custom_call.1} parent=31 // pred_check_branch
          %240 = sbr.rel (%p238) target = $region36
        $region35: #{tpu_custom_call.1} parent=31 // pred_region
          %s241 = sand.u32 %s33, 1
          %s242 = scalar_lea.sflag [#allocation5], %s241
          %s243 = sand.u32 %s33, 1
          %s244 = smul.addr %s243, 8
          %s245 = scalar_lea.vmem [#allocation4], %s244
          %s246 = smul.u32 2, %s23
          %248 = vsyncadd %s242, 0
          %s249 = smul.addr %s246, 4
          %s250 = scalar_lea.hbm %s0, %s249
          %s251 = sshll.u32 %s250, 4
          %s252 = int_to_ptr.hbm [resolvable:$true] %s251
          %s253 = sshll.u32 %s245, 4
          %s254 = int_to_ptr.vmem [resolvable:$true] %s253
          %259 = dma.hbm_to_vmem [thread:$0]  %s252, 128, %s254, %s242, 64, 64, 4
        $region36: #{tpu_custom_call.1} parent=31 // pred_fallthru
          _
      $region32: #{tpu_custom_call.1} parent=5 // pred_fallthru
        _
      %p260 = scmp.le.s32.totalorder 1, %s23
      %p261 = scmp.lt.s32.totalorder %s23, 3
      %p262 = pnand %p260, %p261
      %p263 = pneg %p262
      // Predicated region
      $region37: #{tpu_custom_call.1} parent=5 // pred_check
        _
      $region38: #{tpu_custom_call.1} parent=5 // pred_check_branch
        %265 = sbr.rel (%p262) target = $region40
      $region39: #{tpu_custom_call.1} parent=5 // pred_region
        %s266 = ssub.s32 %s23, 1
        %s267 = sand.u32 %s36, 1
        %s268 = scalar_lea.sflag [#allocation5], %s267
        %s269 = sand.u32 %s36, 1
        %s270 = smul.addr %s269, 8
        %s271 = scalar_lea.vmem [#allocation4], %s270
        // Predicated region
        $region41: #{tpu_custom_call.1} parent=39 // pred_check
          %p272 = pneg %p49
        $region42: #{tpu_custom_call.1} parent=39 // pred_check_branch
          %274 = sbr.rel (%p272) target = $region44
        $region43: #{tpu_custom_call.1} parent=39 // pred_region
          %276 = dma.done %s268, 128
        $region44: #{tpu_custom_call.1} parent=39 // pred_fallthru
          _
        // Predicated region
        $region45: #{tpu_custom_call.1} parent=39 // pred_check
          %p277 = pneg %p70
        $region46: #{tpu_custom_call.1} parent=39 // pred_check_branch
          %279 = sbr.rel (%p277) target = $region48
        $region47: #{tpu_custom_call.1} parent=39 // pred_region
          %281 = dma.done [#allocation8], 256
        $region48: #{tpu_custom_call.1} parent=39 // pred_fallthru
          _
        // Predicated region
        $region49: #{tpu_custom_call.1} parent=39 // pred_check
          %p282 = pneg %p112
        $region50: #{tpu_custom_call.1} parent=39 // pred_check_branch
          %284 = sbr.rel (%p282) target = $region52
        $region51: #{tpu_custom_call.1} parent=39 // pred_region
          %286 = dma.done [#allocation8], 256
        $region52: #{tpu_custom_call.1} parent=39 // pred_fallthru
          _
        %s287 = sand.u32 %s36, 1
        %s288 = scalar_lea.sflag [#allocation5], %s287
        %s289 = sand.u32 %s36, 1
        %s290 = smul.addr %s289, 8
        %s291 = scalar_lea.vmem [#allocation4], %s290
        %p292 = pneg %p49
        %p293 = pneg %p46
        %p294 = pneg %p70
        %p295 = pneg %p67
        %p296 = pneg %p91
        %p297 = pneg %p88
        %p298 = pneg %p112
        %p299 = pneg %p109
        %p300 = pneg %p133
        %p301 = pneg %p130
        %p302 = pneg %p159
        %p303 = pneg %p156
        %s304 = sand.u32 %s146, 1
        %s305 = scalar_lea.sflag [#allocation6], %s304
        %s306 = sand.u32 %s146, 1
        %s307 = smul.addr %s306, 16
        %s308 = scalar_lea.vmem [#allocation10], %s307
        %p309 = pneg %p185
        %p310 = pneg %p182
        %s311 = sand.u32 %s172, 1
        %s312 = scalar_lea.sflag [#allocation12], %s311
        %s313 = sand.u32 %s172, 1
        %s314 = smul.addr %s313, 32
        %s315 = scalar_lea.vmem [#allocation11], %s314
        %s316 = smul.u32 2, %s28
        %s317 = smul.u32 2, %s28
        %s318 = smul.u32 2, %s28
        %v320 = vld [vmem:[%s271] sm:$0xf]
        %v321 = vld [vmem:[%s271 + $0x4] sm:$0xf]
        %v322 = vld [vmem:[#allocation7] sm:$0xf]
        %v323 = vld [vmem:[#allocation7 + $0x4] sm:$0xf]
        %v324 = vld [vmem:[#allocation7 + $0x8] sm:$0xf]
        %v325 = vld [vmem:[#allocation7 + $0xc] sm:$0xf]
        %v326 = vld [vmem:[%s2] sm:$0x1]
        %v328 = vperm.slane %v326, 0
        %v332 = vunpack.c.l.b16 %v320
        %v333 = vunpack.c.l.b16 %v321
        %v334 = vpack.c.b16 %v333, %v332
        %v339 = vunpack.c.l.b16 %v322
        %v340 = vunpack.c.l.b16 %v323
        %v341 = vunpack.c.l.b16 %v324
        %v342 = vunpack.c.l.b16 %v325
        %v343 = vpack.c.b16 %v340, %v339
        %v344 = vpack.c.b16 %v342, %v341
        %vm347 = vcmask 261120
        %v349 = vsel %vm347, %v334, 0
        %351 = vmatpush.bf16.msra.mxu0 0
        %352 = vmatpush.bf16.msra.mxu0 0
        %353 = vmatpush.bf16.msra.mxu0 0
        %354 = vmatpush.bf16.msra.mxu0 0
        %355 = vmatpush.bf16.msra.mxu0 0
        %356 = vmatpush.bf16.msra.mxu0 0
        %357 = vmatpush.bf16.msra.mxu0 %v344
        %358 = vmatpush.bf16.msra.mxu0 %v343
        %359 = vmatmul.bf16.gmra.mxu0 %v349
        %v360 = vpop.f32.mrf.mxu0
        %v361 = vadd.f32 %v328, %v360
        %v362 = vpop.f32.mrf.mxu0
        %v363 = vadd.f32 %v328, %v362
        %364 = vdwg.mxu0
        %v365 = vpack.c.bf16 %v361, %v361
        %v366 = vpack.c.bf16 %v363, %v363
        %vm367 = vcmask 781312
        %368 = vst.msk [vmem:[#allocation2] sm:$0xf] %vm367, %v365
        %369 = vst.msk [vmem:[#allocation2 + $0x4] sm:$0xf] %vm367, %v366
        loop: start=0, step=1, limit=2
        $region53: #{tpu_custom_call.1} parent=39 // loop_pre_header
          _
        $region54: #{tpu_custom_call.1} parent=39 // loop_header
          %s371 = sphi 0, %s375
          %p372 = scmp.ge.s32.totalorder %s371, 2
        $region55: #{tpu_custom_call.1} parent=39 // loop_header_branch
          %374 = sbr.rel (%p372) target = $region59
        $region56: #{tpu_custom_call.1} parent=39 // loop_body
          %s376 = smul.u32 %s371, 8
          %s377 = sshra.s32 %s376, 3
          %s378 = sand.u32 %s376, 7
          %s379 = smul.addr %s377, 4
          %s380 = scalar_lea.vmem [#allocation2], %s379
          %v381 = vld [vmem:[%s380] sm:$0xf]
          %v383 = vunpack.c.l.b16 %v381
          %v384 = vpack.c.b16 %v383, %v383
          %385 = vrot.lane.b32.xlu0 %v384, 96
          %v386 = vpop.permute.xlu0 %385
          %vm387 = vcmask 64512
          %v389 = vsel %vm387, %v381, 0
          %v392 = vsel %vm387, %v386, 0
          %394 = vmatpush.bf16.xpose.msra.mxu0 0
          %395 = vmatpush.bf16.xpose.msra.mxu0 0
          %396 = vmatpush.bf16.xpose.msra.mxu0 0
          %397 = vmatpush.bf16.xpose.msra.mxu0 0
          %398 = vmatpush.bf16.xpose.msra.mxu0 0
          %399 = vmatpush.bf16.xpose.msra.mxu0 0
          %400 = vmatpush.bf16.xpose.msra.mxu0 0
          %401 = vmatpush.bf16.xpose.msra.mxu0 %v392
          %402 = vmatmul.bf16.gmra.mxu0 %v389
          %v403 = vpop.f32.mrf.mxu0
          %v404 = vadd.f32 0.0, %v403
          %v405 = vpop.f32.mrf.mxu0
          %406 = vdwg.mxu0
          %v407 = vsel %vm387, %v404, -inf
          %408 = vmax.xlane.f32.xlu0 %v407
          %v409 = vpop.xlane.xlu0 %408
          %v410 = vsub.f32 %v404, %v409
          %v411 = vmul.f32 %v410, 1.442695
          %v412 = vpow.pop %v411
          %v413 = vsel %vm387, %v412, 0.0
          %414 = vadd.xlane.f32.xlu0 %v413
          %v415 = vpop.xlane.xlu0 %414
          %v416 = vrcp.pop %v415
          %v417 = vmul.f32 %v415, %v416
          %v418 = vsub.f32 1.0, %v417
          %v419 = vmul.f32 %v416, %v418
          %v420 = vadd.f32 %v416, %v419
          %vm421 = vweird.f32 %v415
          %vm422 = vweird.f32 %v416
          %vm423 = vmor %vm421, %vm422
          %v424 = vsel %vm423, %v416, %v420
          %v425 = vand.u32 2147483647, %v415
          %vm426 = vcmp.eq.f32.partialorder %v425, 8.507059e+37
          %v427 = vand.u32 %v415, 2147483648
          %v428 = vor.u32 1.1754944e-38, %v427
          %v429 = vsel %vm426, %v428, %v424
          %v430 = vmul.f32 1.0, %v429
          %v431 = vmul.f32 %v412, %v430
          %v432 = vpack.c.bf16 %v431, %v431
          %s433 = smul.u32 %s371, 4
          %s434 = smul.addr %s433, 4
          %s435 = scalar_lea.vmem %s315, %s434 [#allocation11]
          %vm436 = vcmask 60416
          %437 = vst.msk [vmem:[%s435] sm:$0xf] %vm436, %v432
          %438 = vrot.lane.b32.xlu0 %v384, 64
          %v439 = vpop.permute.xlu0 %438
          %v441 = vsel %vm387, %v432, 0
          %vm443 = vcmask 1043456
          %v445 = vsel %vm443, %v439, 0
          %447 = vmatpush.bf16.msra.mxu0 0
          %448 = vmatpush.bf16.msra.mxu0 0
          %449 = vmatpush.bf16.msra.mxu0 0
          %450 = vmatpush.bf16.msra.mxu0 0
          %451 = vmatpush.bf16.msra.mxu0 0
          %452 = vmatpush.bf16.msra.mxu0 0
          %453 = vmatpush.bf16.msra.mxu0 0
          %454 = vmatpush.bf16.msra.mxu0 %v445
          %455 = vmatmul.bf16.gmra.mxu0 %v441
          %v456 = vpop.f32.mrf.mxu0
          %v457 = vadd.f32 0.0, %v456
          %v458 = vpop.f32.mrf.mxu0
          %459 = vdwg.mxu0
          %v460 = vpack.c.bf16 %v457, %v457
          %s461 = smul.addr %s377, 4
          %s462 = scalar_lea.vmem [#allocation3], %s461
          %463 = vst.msk [vmem:[%s462] sm:$0xf] %vm436, %v460
          %v464 = vld [vmem:[%s380] sm:$0xf]
          %v466 = vunpack.c.l.b16 %v464
          %v467 = vpack.c.b16 %v466, %v466
          %468 = vrot.lane.b32.xlu0 %v467, 120
          %v469 = vpop.permute.xlu0 %468
          %470 = vrot.lane.b32.xlu0 %v467, 88
          %v471 = vpop.permute.xlu0 %470
          %v473 = vsel %vm387, %v469, 0
          %v476 = vsel %vm387, %v471, 0
          %478 = vmatpush.bf16.xpose.msra.mxu0 0
          %479 = vmatpush.bf16.xpose.msra.mxu0 0
          %480 = vmatpush.bf16.xpose.msra.mxu0 0
          %481 = vmatpush.bf16.xpose.msra.mxu0 0
          %482 = vmatpush.bf16.xpose.msra.mxu0 0
          %483 = vmatpush.bf16.xpose.msra.mxu0 0
          %484 = vmatpush.bf16.xpose.msra.mxu0 0
          %485 = vmatpush.bf16.xpose.msra.mxu0 %v476
          %486 = vmatmul.bf16.gmra.mxu0 %v473
          %v487 = vpop.f32.mrf.mxu0
          %v488 = vadd.f32 0.0, %v487
          %v489 = vpop.f32.mrf.mxu0
          %490 = vdwg.mxu0
          %v491 = vsel %vm387, %v488, -inf
          %492 = vmax.xlane.f32.xlu0 %v491
          %v493 = vpop.xlane.xlu0 %492
          %v494 = vsub.f32 %v488, %v493
          %v495 = vmul.f32 %v494, 1.442695
          %v496 = vpow.pop %v495
          %v497 = vsel %vm387, %v496, 0.0
          %498 = vadd.xlane.f32.xlu0 %v497
          %v499 = vpop.xlane.xlu0 %498
          %v500 = vrcp.pop %v499
          %v501 = vmul.f32 %v499, %v500
          %v502 = vsub.f32 1.0, %v501
          %v503 = vmul.f32 %v500, %v502
          %v504 = vadd.f32 %v500, %v503
          %vm505 = vweird.f32 %v499
          %vm506 = vweird.f32 %v500
          %vm507 = vmor %vm505, %vm506
          %v508 = vsel %vm507, %v500, %v504
          %v509 = vand.u32 2147483647, %v499
          %vm510 = vcmp.eq.f32.partialorder %v509, 8.507059e+37
          %v511 = vand.u32 %v499, 2147483648
          %v512 = vor.u32 1.1754944e-38, %v511
          %v513 = vsel %vm510, %v512, %v508
          %v514 = vmul.f32 1.0, %v513
          %v515 = vmul.f32 %v496, %v514
          %v516 = vpack.c.bf16 %v515, %v515
          %s517 = sadd.s32 1, %s433
          %s518 = smul.addr %s517, 4
          %s519 = scalar_lea.vmem %s315, %s518 [#allocation11]
          %520 = vst.msk [vmem:[%s519] sm:$0xf] %vm436, %v516
          %521 = vrot.lane.b32.xlu0 %v467, 56
          %v522 = vpop.permute.xlu0 %521
          %v524 = vsel %vm387, %v516, 0
          %v527 = vsel %vm443, %v522, 0
          %529 = vmatpush.bf16.msra.mxu0 0
          %530 = vmatpush.bf16.msra.mxu0 0
          %531 = vmatpush.bf16.msra.mxu0 0
          %532 = vmatpush.bf16.msra.mxu0 0
          %533 = vmatpush.bf16.msra.mxu0 0
          %534 = vmatpush.bf16.msra.mxu0 0
          %535 = vmatpush.bf16.msra.mxu0 0
          %536 = vmatpush.bf16.msra.mxu0 %v527
          %537 = vmatmul.bf16.gmra.mxu0 %v524
          %v538 = vpop.f32.mrf.mxu0
          %v539 = vadd.f32 0.0, %v538
          %v540 = vpop.f32.mrf.mxu0
          %541 = vdwg.mxu0
          %v542 = vpack.c.bf16 %v539, %v539
          %544 = vrot.lane.b32.xlu0 %v542, 8
          %v545 = vpop.permute.xlu0 %544
          %vm547 = vcmask 126016
          %548 = vst.msk [vmem:[%s462] sm:$0xf] %vm547, %v545
          %v549 = vld [vmem:[%s380] sm:$0xf]
          %v551 = vunpack.c.l.b16 %v549
          %v552 = vpack.c.b16 %v551, %v551
          %553 = vrot.lane.b32.xlu0 %v552, 112
          %v554 = vpop.permute.xlu0 %553
          %555 = vrot.lane.b32.xlu0 %v552, 80
          %v556 = vpop.permute.xlu0 %555
          %v558 = vsel %vm387, %v554, 0
          %v561 = vsel %vm387, %v556, 0
          %563 = vmatpush.bf16.xpose.msra.mxu0 0
          %564 = vmatpush.bf16.xpose.msra.mxu0 0
          %565 = vmatpush.bf16.xpose.msra.mxu0 0
          %566 = vmatpush.bf16.xpose.msra.mxu0 0
          %567 = vmatpush.bf16.xpose.msra.mxu0 0
          %568 = vmatpush.bf16.xpose.msra.mxu0 0
          %569 = vmatpush.bf16.xpose.msra.mxu0 0
          %570 = vmatpush.bf16.xpose.msra.mxu0 %v561
          %571 = vmatmul.bf16.gmra.mxu0 %v558
          %v572 = vpop.f32.mrf.mxu0
          %v573 = vadd.f32 0.0, %v572
          %v574 = vpop.f32.mrf.mxu0
          %575 = vdwg.mxu0
          %v576 = vsel %vm387, %v573, -inf
          %577 = vmax.xlane.f32.xlu0 %v576
          %v578 = vpop.xlane.xlu0 %577
          %v579 = vsub.f32 %v573, %v578
          %v580 = vmul.f32 %v579, 1.442695
          %v581 = vpow.pop %v580
          %v582 = vsel %vm387, %v581, 0.0
          %583 = vadd.xlane.f32.xlu0 %v582
          %v584 = vpop.xlane.xlu0 %583
          %v585 = vrcp.pop %v584
          %v586 = vmul.f32 %v584, %v585
          %v587 = vsub.f32 1.0, %v586
          %v588 = vmul.f32 %v585, %v587
          %v589 = vadd.f32 %v585, %v588
          %vm590 = vweird.f32 %v584
          %vm591 = vweird.f32 %v585
          %vm592 = vmor %vm590, %vm591
          %v593 = vsel %vm592, %v585, %v589
          %v594 = vand.u32 2147483647, %v584
          %vm595 = vcmp.eq.f32.partialorder %v594, 8.507059e+37
          %v596 = vand.u32 %v584, 2147483648
          %v597 = vor.u32 1.1754944e-38, %v596
          %v598 = vsel %vm595, %v597, %v593
          %v599 = vmul.f32 1.0, %v598
          %v600 = vmul.f32 %v581, %v599
          %v601 = vpack.c.bf16 %v600, %v600
          %s602 = sadd.s32 2, %s433
          %s603 = smul.addr %s602, 4
          %s604 = scalar_lea.vmem %s315, %s603 [#allocation11]
          %605 = vst.msk [vmem:[%s604] sm:$0xf] %vm436, %v601
          %606 = vrot.lane.b32.xlu0 %v552, 48
          %v607 = vpop.permute.xlu0 %606
          %v609 = vsel %vm387, %v601, 0
          %v612 = vsel %vm443, %v607, 0
          %614 = vmatpush.bf16.msra.mxu0 0
          %615 = vmatpush.bf16.msra.mxu0 0
          %616 = vmatpush.bf16.msra.mxu0 0
          %617 = vmatpush.bf16.msra.mxu0 0
          %618 = vmatpush.bf16.msra.mxu0 0
          %619 = vmatpush.bf16.msra.mxu0 0
          %620 = vmatpush.bf16.msra.mxu0 0
          %621 = vmatpush.bf16.msra.mxu0 %v612
          %622 = vmatmul.bf16.gmra.mxu0 %v609
          %v623 = vpop.f32.mrf.mxu0
          %v624 = vadd.f32 0.0, %v623
          %v625 = vpop.f32.mrf.mxu0
          %626 = vdwg.mxu0
          %v627 = vpack.c.bf16 %v624, %v624
          %629 = vrot.lane.b32.xlu0 %v627, 16
          %v630 = vpop.permute.xlu0 %629
          %vm632 = vcmask 191616
          %633 = vst.msk [vmem:[%s462] sm:$0xf] %vm632, %v630
          %v634 = vld [vmem:[%s380] sm:$0xf]
          %v636 = vunpack.c.l.b16 %v634
          %v637 = vpack.c.b16 %v636, %v636
          %638 = vrot.lane.b32.xlu0 %v637, 104
          %v639 = vpop.permute.xlu0 %638
          %640 = vrot.lane.b32.xlu0 %v637, 72
          %v641 = vpop.permute.xlu0 %640
          %v643 = vsel %vm387, %v639, 0
          %v646 = vsel %vm387, %v641, 0
          %648 = vmatpush.bf16.xpose.msra.mxu0 0
          %649 = vmatpush.bf16.xpose.msra.mxu0 0
          %650 = vmatpush.bf16.xpose.msra.mxu0 0
          %651 = vmatpush.bf16.xpose.msra.mxu0 0
          %652 = vmatpush.bf16.xpose.msra.mxu0 0
          %653 = vmatpush.bf16.xpose.msra.mxu0 0
          %654 = vmatpush.bf16.xpose.msra.mxu0 0
          %655 = vmatpush.bf16.xpose.msra.mxu0 %v646
          %656 = vmatmul.bf16.gmra.mxu0 %v643
          %v657 = vpop.f32.mrf.mxu0
          %v658 = vadd.f32 0.0, %v657
          %v659 = vpop.f32.mrf.mxu0
          %660 = vdwg.mxu0
          %v661 = vsel %vm387, %v658, -inf
          %662 = vmax.xlane.f32.xlu0 %v661
          %v663 = vpop.xlane.xlu0 %662
          %v664 = vsub.f32 %v658, %v663
          %v665 = vmul.f32 %v664, 1.442695
          %v666 = vpow.pop %v665
          %v667 = vsel %vm387, %v666, 0.0
          %668 = vadd.xlane.f32.xlu0 %v667
          %v669 = vpop.xlane.xlu0 %668
          %v670 = vrcp.pop %v669
          %v671 = vmul.f32 %v669, %v670
          %v672 = vsub.f32 1.0, %v671
          %v673 = vmul.f32 %v670, %v672
          %v674 = vadd.f32 %v670, %v673
          %vm675 = vweird.f32 %v669
          %vm676 = vweird.f32 %v670
          %vm677 = vmor %vm675, %vm676
          %v678 = vsel %vm677, %v670, %v674
          %v679 = vand.u32 2147483647, %v669
          %vm680 = vcmp.eq.f32.partialorder %v679, 8.507059e+37
          %v681 = vand.u32 %v669, 2147483648
          %v682 = vor.u32 1.1754944e-38, %v681
          %v683 = vsel %vm680, %v682, %v678
          %v684 = vmul.f32 1.0, %v683
          %v685 = vmul.f32 %v666, %v684
          %v686 = vpack.c.bf16 %v685, %v685
          %s687 = sadd.s32 3, %s433
          %s688 = smul.addr %s687, 4
          %s689 = scalar_lea.vmem %s315, %s688 [#allocation11]
          %690 = vst.msk [vmem:[%s689] sm:$0xf] %vm436, %v686
          %691 = vrot.lane.b32.xlu0 %v637, 40
          %v692 = vpop.permute.xlu0 %691
          %v694 = vsel %vm387, %v686, 0
          %v697 = vsel %vm443, %v692, 0
          %699 = vmatpush.bf16.msra.mxu0 0
          %700 = vmatpush.bf16.msra.mxu0 0
          %701 = vmatpush.bf16.msra.mxu0 0
          %702 = vmatpush.bf16.msra.mxu0 0
          %703 = vmatpush.bf16.msra.mxu0 0
          %704 = vmatpush.bf16.msra.mxu0 0
          %705 = vmatpush.bf16.msra.mxu0 0
          %706 = vmatpush.bf16.msra.mxu0 %v697
          %707 = vmatmul.bf16.gmra.mxu0 %v694
          %v708 = vpop.f32.mrf.mxu0
          %v709 = vadd.f32 0.0, %v708
          %v710 = vpop.f32.mrf.mxu0
          %711 = vdwg.mxu0
          %v712 = vpack.c.bf16 %v709, %v709
          %714 = vrot.lane.b32.xlu0 %v712, 24
          %v715 = vpop.permute.xlu0 %714
          %vm717 = vcmask 257216
          %718 = vst.msk [vmem:[%s462] sm:$0xf] %vm717, %v715
        $region57: #{tpu_custom_call.1} parent=39 // loop_footer
          %s375 = sadd.s32 1, %s371
        $region58: #{tpu_custom_call.1} parent=39 // loop_footer_branch
          %370 = sbr.rel target = $region54
        $region59: #{tpu_custom_call.1} parent=39 // loop_exit
          _
        %v719 = vld [vmem:[#allocation3] sm:$0xf]
        %v720 = vld [vmem:[#allocation3 + $0x4] sm:$0xf]
        %v721 = vld [vmem:[#allocation9] sm:$0xf]
        %v722 = vld [vmem:[#allocation9 + $0x4] sm:$0xf]
        %v723 = vld [vmem:[#allocation9 + $0x8] sm:$0xf]
        %v724 = vld [vmem:[#allocation9 + $0xc] sm:$0xf]
        %v725 = vld [vmem:[%s4] sm:$0x1]
        %v727 = vperm.slane %v725, 0
        %v731 = vunpack.c.l.b16 %v719
        %v732 = vunpack.c.l.b16 %v720
        %v733 = vpack.c.b16 %v732, %v731
        %v738 = vunpack.c.l.b16 %v721
        %v739 = vunpack.c.l.b16 %v722
        %v740 = vunpack.c.l.b16 %v723
        %v741 = vunpack.c.l.b16 %v724
        %v742 = vpack.c.b16 %v739, %v738
        %v743 = vpack.c.b16 %v741, %v740
        %v747 = vsel %vm347, %v733, 0
        %749 = vmatpush.bf16.msra.mxu0 0
        %750 = vmatpush.bf16.msra.mxu0 0
        %751 = vmatpush.bf16.msra.mxu0 0
        %752 = vmatpush.bf16.msra.mxu0 0
        %753 = vmatpush.bf16.msra.mxu0 0
        %754 = vmatpush.bf16.msra.mxu0 0
        %755 = vmatpush.bf16.msra.mxu0 %v743
        %756 = vmatpush.bf16.msra.mxu0 %v742
        %757 = vmatmul.bf16.gmra.mxu0 %v747
        %v758 = vpop.f32.mrf.mxu0
        %v759 = vadd.f32 %v727, %v758
        %v760 = vpop.f32.mrf.mxu0
        %v761 = vadd.f32 %v727, %v760
        %762 = vdwg.mxu0
        %763 = vst.msk [vmem:[%s308] sm:$0xff] %vm347, %v759
        %764 = vst.msk [vmem:[%s308 + $0x8] sm:$0xff] %vm347, %v761
        %s765 = sand.u32 %s146, 1
        %s766 = scalar_lea.sflag [#allocation6], %s765
        %s767 = sand.u32 %s146, 1
        %s768 = smul.addr %s767, 16
        %s769 = scalar_lea.vmem [#allocation10], %s768
        %s770 = sand.u32 %s172, 1
        %s771 = scalar_lea.sflag [#allocation12], %s770
        %s772 = sand.u32 %s172, 1
        %s773 = smul.addr %s772, 32
        %s774 = scalar_lea.vmem [#allocation11], %s773
        // Predicated region
        $region60: #{tpu_custom_call.1} parent=39 // pred_check
          %p775 = pneg %p156
        $region61: #{tpu_custom_call.1} parent=39 // pred_check_branch
          %777 = sbr.rel (%p775) target = $region63
        $region62: #{tpu_custom_call.1} parent=39 // pred_region
          %s778 = smul.u32 2, %s28
          %780 = vsyncadd %s766, 0
          %s781 = smul.addr %s778, 8
          %s782 = scalar_lea.hbm %s5, %s781
          %s783 = sshll.u32 %s769, 4
          %s784 = int_to_ptr.vmem [resolvable:$true] %s783
          %s785 = sshll.u32 %s782, 4
          %s786 = int_to_ptr.hbm [resolvable:$true] %s785
          %791 = dma.vmem_to_hbm [thread:$0]  %s784, 256, %s786, %s766, 128, 128, 8
        $region63: #{tpu_custom_call.1} parent=39 // pred_fallthru
          _
        // Predicated region
        $region64: #{tpu_custom_call.1} parent=39 // pred_check
          %p792 = pneg %p182
        $region65: #{tpu_custom_call.1} parent=39 // pred_check_branch
          %794 = sbr.rel (%p792) target = $region67
        $region66: #{tpu_custom_call.1} parent=39 // pred_region
          %s795 = smul.u32 2, %s28
          %797 = vsyncadd %s771, 0
          %s798 = smul.addr %s795, 4
          %s799 = smul.addr %s798, 4
          %s800 = scalar_lea.hbm %s6, %s799
          %s801 = sshll.u32 %s774, 4
          %s802 = int_to_ptr.vmem [resolvable:$true] %s801
          %s803 = sshll.u32 %s800, 4
          %s804 = int_to_ptr.hbm [resolvable:$true] %s803
          %809 = dma.vmem_to_hbm [thread:$0]  %s802, 512, %s804, %s771, 64, 64, 4
        $region67: #{tpu_custom_call.1} parent=39 // pred_fallthru
          _
      $region40: #{tpu_custom_call.1} parent=5 // pred_fallthru
        _
      %p810 = scmp.le.s32.totalorder 2, %s23
      // Predicated region
      $region68: #{tpu_custom_call.1} parent=5 // pred_check
        %p811 = pneg %p810
      $region69: #{tpu_custom_call.1} parent=5 // pred_check_branch
        %813 = sbr.rel (%p811) target = $region71
      $region70: #{tpu_custom_call.1} parent=5 // pred_region
        %s814 = ssub.s32 %s23, 2
        // Predicated region
        $region72: #{tpu_custom_call.1} parent=70 // pred_check
          %p815 = pneg %p162
        $region73: #{tpu_custom_call.1} parent=70 // pred_check_branch
          %817 = sbr.rel (%p815) target = $region75
        $region74: #{tpu_custom_call.1} parent=70 // pred_region
          %s818 = sand.u32 %s147, 1
          %s819 = scalar_lea.sflag [#allocation6], %s818
          %s820 = sand.u32 %s147, 1
          %s821 = smul.addr %s820, 16
          %s822 = scalar_lea.vmem [#allocation10], %s821
          %824 = dma.done %s819, 256
        $region75: #{tpu_custom_call.1} parent=70 // pred_fallthru
          _
        // Predicated region
        $region76: #{tpu_custom_call.1} parent=70 // pred_check
          %p825 = pneg %p188
        $region77: #{tpu_custom_call.1} parent=70 // pred_check_branch
          %827 = sbr.rel (%p825) target = $region79
        $region78: #{tpu_custom_call.1} parent=70 // pred_region
          %s828 = sand.u32 %s173, 1
          %s829 = scalar_lea.sflag [#allocation12], %s828
          %s830 = sand.u32 %s173, 1
          %s831 = smul.addr %s830, 32
          %s832 = scalar_lea.vmem [#allocation11], %s831
          %834 = dma.done %s829, 512
        $region79: #{tpu_custom_call.1} parent=70 // pred_fallthru
          _
      $region71: #{tpu_custom_call.1} parent=5 // pred_fallthru
        _
    $region6: #{tpu_custom_call.1} parent=1 // loop_footer
      %s27 = sadd.s32 1, %s23
    $region7: #{tpu_custom_call.1} parent=1 // loop_footer_branch
      %22 = sbr.rel target = $region3
    $region8: #{tpu_custom_call.1} parent=1 // loop_exit
      _
    %835 = vsyncpa [#allocation5], 1
    %s836 = scalar_lea.sflag [#allocation5], 1
    %837 = vsyncpa %s836, 1
    %838 = vsyncpa [#allocation8], 1
    %839 = vsyncpa [#allocation6], 1
    %s840 = scalar_lea.sflag [#allocation6], 1
    %841 = vsyncpa %s840, 1
    %842 = vsyncpa [#allocation12], 1
    %s843 = scalar_lea.sflag [#allocation12], 1
    %844 = vsyncpa %s843, 1

</llo_original>
